<compile_context>
chip_gen: v5e
topology: v5e:2x2
jax: 0.10.0
libtpu: 0.0.40
codegen_flags: <defaults>
</compile_context>

<pallas_src>
import functools

import jax
import jax.numpy as jnp
from jax.experimental import pallas as pl
from jax.experimental.pallas import tpu as pltpu


def _kl_kernel(x_ref, t_ref, out_ref, acc_ref, *, inv_t, rem, apply_scale):
    j = pl.program_id(1)
    nj = pl.num_programs(1)

    @pl.when(j == 0)
    def _():
        acc_ref[...] = jnp.zeros_like(acc_ref)

    x = x_ref[...].astype(jnp.float32)            # (nb, C, TILE) logits
    if apply_scale:                               # statically skipped when T == 1
        x = x * inv_t
    t = t_ref[...].astype(jnp.float32)            # (nb, C, TILE) target probs

    if rem:
        # Only emitted when HW % tile != 0, and only active on the last tile.
        # Masking t to 0 alone zeroes the padded lanes' contribution (point is
        # select()'d on t > 0), so x needs no mask.  (1,1,TILE) iota broadcasts.
        col = jax.lax.broadcasted_iota(jnp.int32, (1, 1, t.shape[-1]), 2)
        keep = jnp.logical_or(j != nj - 1, col < rem)
        t = jnp.where(keep, t, 0.0)

    # Numerically stable log_softmax over the class axis (axis=1).
    m = jnp.max(x, axis=1, keepdims=True)                            # (nb,1,TILE)
    lse = m + jnp.log(jnp.sum(jnp.exp(x - m), axis=1, keepdims=True))
    logp = x - lse                                                   # (nb,C,TILE)

    # torch F.kl_div pointwise term with the xlogy(0, 0) == 0 convention.
    pos = t > 0.0
    point = jnp.where(pos, t * (jnp.log(jnp.where(pos, t, 1.0)) - logp), 0.0)

    # Accumulate a single lane-width vector: N and C sums are cheap sublane
    # reduces and the per-step read-modify-write touches only (1, TILE).
    acc_ref[...] += jnp.sum(point, axis=(0, 1))[None, :]

    @pl.when(j == nj - 1)
    def _():
        out_ref[0, 0] = jnp.sum(acc_ref[...])


def _choose_tiles(N, C, HW, in_itemsize, tgt_itemsize, budget_bytes):
    # Lane-dense spatial tile: full HW if small, else 128-aligned, <= 1024.
    tile_hw = HW if HW <= 1024 else 1024

    def footprint(nb, tile):
        blk = nb * C * tile
        inputs = 2 * blk * (in_itemsize + tgt_itemsize)   # double-buffered blocks
        temps = 6 * blk * 4                               # full-block f32 temporaries
        acc = tile * 4
        return inputs + temps + acc

    # Largest divisor of N whose block footprint fits the budget (no N padding).
    nb = 1
    for d in range(N, 0, -1):
        if N % d == 0 and footprint(d, tile_hw) <= budget_bytes:
            nb = d
            break

    # Shrink the spatial tile (128-aligned) if even nb == 1 does not fit.
    while tile_hw > 128 and footprint(nb, tile_hw) > budget_bytes:
        tile_hw = max(128, (tile_hw // 2) // 128 * 128)

    return nb, tile_hw


def kl_divergence_loss(input_nchw, target_prob, *, T=1.0):
    """T^2 * F.kl_div(F.log_softmax(input/T, dim=1), target_prob), reduction='mean'."""
    N, C, H, W = input_nchw.shape
    assert target_prob.shape == input_nchw.shape
    HW = H * W

    # Free reshapes (contiguous NCHW -> (N, C, H*W)); no transpose, no HBM copy.
    x = input_nchw.reshape(N, C, HW)
    t = target_prob.reshape(N, C, HW)

    # Generation-aware VMEM budget (v7x has only 64 MiB physical per TC).
    try:
        phys_vmem = pltpu.get_tpu_info().vmem_capacity_bytes
    except Exception:
        phys_vmem = 64 * 2**20   # conservative fallback
    budget = min(phys_vmem // 2, 48 * 2**20)

    nb, tile_hw = _choose_tiles(
        N, C, HW,
        jnp.dtype(x.dtype).itemsize, jnp.dtype(t.dtype).itemsize, budget)
    n_tiles = N // nb
    hw_tiles = pl.cdiv(HW, tile_hw)
    rem = HW % tile_hw

    kernel = functools.partial(
        _kl_kernel, inv_t=1.0 / float(T), rem=rem, apply_scale=(float(T) != 1.0))

    partials = pl.pallas_call(
        kernel,
        out_shape=jax.ShapeDtypeStruct((n_tiles, 1), jnp.float32),
        grid_spec=pltpu.PrefetchScalarGridSpec(
            num_scalar_prefetch=0,
            grid=(n_tiles, hw_tiles),
            in_specs=[
                pl.BlockSpec((nb, C, tile_hw), lambda i, j: (i, 0, j)),
                pl.BlockSpec((nb, C, tile_hw), lambda i, j: (i, 0, j)),
            ],
            out_specs=pl.BlockSpec((1, 1), lambda i, j: (i, 0),
                                   memory_space=pltpu.SMEM),
            scratch_shapes=[pltpu.VMEM((1, tile_hw), jnp.float32)],
        ),
        compiler_params=pltpu.CompilerParams(
            # N-tile axis is independent ("parallel": shards across v7x's two
            # TensorCores); the spatial axis carries the running accumulator.
            dimension_semantics=("parallel", "arbitrary"),
            vmem_limit_bytes=int(max(budget, 32 * 2**20)),
        ),
    )(x, t)
    # TODO(synk): if xprof shows exposed DMA on large shapes, sweep
    # pipeline_mode=pl.Buffered(3) on the two input BlockSpecs.

    numel = N * C * H * W
    loss = (float(T) * float(T)) * jnp.sum(partials) / jnp.float32(numel)
    return loss.astype(input_nchw.dtype)


def _reference(x_nchw, t_nchw, T=1.0):
    # Pure-JAX reference (not part of the kernel hot path).
    logp = jax.nn.log_softmax(x_nchw.astype(jnp.float32) / T, axis=1)
    t = t_nchw.astype(jnp.float32)
    pos = t > 0
    point = jnp.where(pos, t * (jnp.log(jnp.where(pos, t, 1.0)) - logp), 0.0)
    return (float(T) * float(T)) * jnp.mean(point)


if __name__ == "__main__":
    key = jax.random.PRNGKey(0)
    k1, k2, k3 = jax.random.split(key, 3)

    N, C, H, W = 2, 4, 16, 16
    T = 2.0
    logits = jax.random.normal(k1, (N, C, H, W), dtype=jnp.float32)
    # Soft targets: a probability distribution over the channel dim, with some
    # exact zeros sprinkled in to exercise the xlogy(0, 0) == 0 path.
    target_prob = jax.nn.softmax(jax.random.normal(k2, (N, C, H, W)), axis=1)
    zero_mask = jax.random.bernoulli(k3, 0.1, (N, C, H, W))
    target_prob = jnp.where(zero_mask, 0.0, target_prob).astype(jnp.float32)

    loss = jax.block_until_ready(kl_divergence_loss(logits, target_prob, T=T))
    ref = jax.block_until_ready(_reference(logits, target_prob, T=T))
    assert jnp.allclose(loss, ref, atol=1e-5, rtol=1e-5), (loss, ref)

    print("KERNEL_OK")
</pallas_src>

<mosaic_0001>
module attributes {stable_mosaic.version = 11 : i64} {
  func.func @_kl_kernel(%arg0: i32, %arg1: i32, %arg2: memref<2x4x256xf32, #tpu.memory_space<vmem>>, %arg3: memref<2x4x256xf32, #tpu.memory_space<vmem>>, %arg4: memref<1x1xf32, #tpu.memory_space<smem>>, %arg5: memref<1x256xf32, #tpu.memory_space<vmem>>) attributes {dimension_semantics = [#tpu.dimension_semantics<parallel>, #tpu.dimension_semantics<arbitrary>], iteration_bounds = array<i64: 1, 1>, scalar_prefetch = 0 : i64, scratch_operands = 1 : i64, tpu.core_type = #tpu.core_type<tc>, window_params = [{transform_indices = @transform_0, window_bounds = array<i64: 2, 4, 256>}, {transform_indices = @transform_1, window_bounds = array<i64: 2, 4, 256>}, {transform_indices = @transform_2, window_bounds = array<i64: 1, 1>}]} {
    %c0_i32 = arith.constant 0 : i32
    %0 = arith.cmpi eq, %arg1, %c0_i32 : i32
    %1 = arith.extui %0 : i1 to i32
    %c0_i32_0 = arith.constant 0 : i32
    %2 = arith.cmpi ne, %1, %c0_i32_0 : i32
    scf.if %2 {
      %cst_18 = arith.constant 0.000000e+00 : f32
      %35 = vector.broadcast %cst_18 : f32 to vector<1x256xf32>
      %c0_19 = arith.constant 0 : index
      %c0_20 = arith.constant 0 : index
      %36 = vector.load %arg5[%c0_19, %c0_20] : memref<1x256xf32, #tpu.memory_space<vmem>>, vector<1x256xf32>
      tpu.vector_store %arg5[%c0_19, %c0_20], %35 {strides = array<i32>} : memref<1x256xf32, #tpu.memory_space<vmem>>, vector<1x256xf32>,
    } else {
    }
    %c0 = arith.constant 0 : index
    %c0_1 = arith.constant 0 : index
    %c0_2 = arith.constant 0 : index
    %3 = vector.load %arg2[%c0, %c0_1, %c0_2] : memref<2x4x256xf32, #tpu.memory_space<vmem>>, vector<2x4x256xf32>
    %cst = arith.constant 5.000000e-01 : f32
    %4 = vector.broadcast %cst : f32 to vector<2x4x256xf32>
    %5 = arith.mulf %3, %4 : vector<2x4x256xf32>
    %c0_3 = arith.constant 0 : index
    %c0_4 = arith.constant 0 : index
    %c0_5 = arith.constant 0 : index
    %6 = vector.load %arg3[%c0_3, %c0_4, %c0_5] : memref<2x4x256xf32, #tpu.memory_space<vmem>>, vector<2x4x256xf32>
    %cst_6 = arith.constant dense<0xFF800000> : vector<2x256xf32>
    %7 = vector.multi_reduction <maximumf>, %5, %cst_6 [1] : vector<2x4x256xf32> to vector<2x256xf32>
    %8 = vector.shape_cast %7 : vector<2x256xf32> to vector<2x1x256xf32>
    %9 = vector.broadcast %8 : vector<2x1x256xf32> to vector<2x4x256xf32>
    %10 = arith.subf %5, %9 : vector<2x4x256xf32>
    %11 = math.exp %10 : vector<2x4x256xf32>
    %cst_7 = arith.constant dense<0.000000e+00> : vector<2x256xf32>
    %12 = vector.multi_reduction <add>, %11, %cst_7 [1] : vector<2x4x256xf32> to vector<2x256xf32>
    %13 = vector.shape_cast %12 : vector<2x256xf32> to vector<2x1x256xf32>
    %14 = math.log %13 : vector<2x1x256xf32>
    %15 = arith.addf %8, %14 : vector<2x1x256xf32>
    %16 = vector.broadcast %15 : vector<2x1x256xf32> to vector<2x4x256xf32>
    %17 = arith.subf %5, %16 : vector<2x4x256xf32>
    %cst_8 = arith.constant 0.000000e+00 : f32
    %18 = vector.broadcast %cst_8 : f32 to vector<2x4x256xf32>
    %19 = arith.cmpf ogt, %6, %18 : vector<2x4x256xf32>
    %cst_9 = arith.constant 1.000000e+00 : f32
    %20 = vector.broadcast %cst_9 : f32 to vector<2x4x256xf32>
    %21 = arith.select %19, %6, %20 : vector<2x4x256xi1>, vector<2x4x256xf32>
    %22 = math.log %21 : vector<2x4x256xf32>
    %23 = arith.subf %22, %17 : vector<2x4x256xf32>
    %24 = arith.mulf %6, %23 : vector<2x4x256xf32>
    %cst_10 = arith.constant 0.000000e+00 : f32
    %25 = vector.broadcast %cst_10 : f32 to vector<2x4x256xf32>
    %26 = arith.select %19, %24, %25 : vector<2x4x256xi1>, vector<2x4x256xf32>
    %c0_11 = arith.constant 0 : index
    %c0_12 = arith.constant 0 : index
    %27 = vector.load %arg5[%c0_11, %c0_12] : memref<1x256xf32, #tpu.memory_space<vmem>>, vector<1x256xf32>
    %cst_13 = arith.constant dense<0.000000e+00> : vector<256xf32>
    %28 = vector.multi_reduction <add>, %26, %cst_13 [0, 1] : vector<2x4x256xf32> to vector<256xf32>
    %29 = vector.shape_cast %28 : vector<256xf32> to vector<1x256xf32>
    %30 = arith.addf %27, %29 : vector<1x256xf32>
    %c0_14 = arith.constant 0 : index
    %c0_15 = arith.constant 0 : index
    %31 = vector.load %arg5[%c0_14, %c0_15] : memref<1x256xf32, #tpu.memory_space<vmem>>, vector<1x256xf32>
    tpu.vector_store %arg5[%c0_14, %c0_15], %30 {strides = array<i32>} : memref<1x256xf32, #tpu.memory_space<vmem>>, vector<1x256xf32>,
    %c0_i32_16 = arith.constant 0 : i32
    %32 = arith.cmpi eq, %arg1, %c0_i32_16 : i32
    %33 = arith.extui %32 : i1 to i32
    %c0_i32_17 = arith.constant 0 : i32
    %34 = arith.cmpi ne, %33, %c0_i32_17 : i32
    scf.if %34 {
      %c0_18 = arith.constant 0 : index
      %c0_19 = arith.constant 0 : index
      %35 = vector.load %arg5[%c0_18, %c0_19] : memref<1x256xf32, #tpu.memory_space<vmem>>, vector<1x256xf32>
      %36 = vector.shape_cast %35 : vector<1x256xf32> to vector<1x1x256xf32>
      %cst_20 = arith.constant dense<0.000000e+00> : vector<1xf32>
      %37 = vector.multi_reduction <add>, %36, %cst_20 [1, 2] : vector<1x1x256xf32> to vector<1xf32>
      %38 = vector.shape_cast %37 : vector<1xf32> to vector<1x1x1xf32>
      %39 = vector.extract %38[0, 0, 0] : f32 from vector<1x1x1xf32>
      %c0_21 = arith.constant 0 : index
      %c0_22 = arith.constant 0 : index
      %40 = memref.load %arg4[%c0_21, %c0_22] : memref<1x1xf32, #tpu.memory_space<smem>>
      memref.store %39, %arg4[%c0_21, %c0_22] : memref<1x1xf32, #tpu.memory_space<smem>>
    } else {
    }
    return
  }
  func.func @transform_0(%arg0: i32, %arg1: i32) -> (i32, i32, i32) {
    %c0_i32 = arith.constant 0 : i32
    %c0_i32_0 = arith.constant 0 : i32
    return %arg0, %c0_i32, %arg1 : i32, i32, i32
  }
  func.func @transform_1(%arg0: i32, %arg1: i32) -> (i32, i32, i32) {
    %c0_i32 = arith.constant 0 : i32
    %c0_i32_0 = arith.constant 0 : i32
    return %arg0, %c0_i32, %arg1 : i32, i32, i32
  }
  func.func @transform_2(%arg0: i32, %arg1: i32) -> (i32, i32) {
    %c0_i32 = arith.constant 0 : i32
    %c0_i32_0 = arith.constant 0 : i32
    return %arg0, %c0_i32 : i32, i32
  }
}

</mosaic_0001>

<llo_original>
// kernel: tpu_custom_call.1
$region0: #{tpu_custom_call.1}
  #allocation0 [shape = 'u32[]', space=smem, size = 0x4, offset = 0x4, fixed_abs, tag = 'smem constant byte address 0x4 - core index']
  #allocation1 [shape = 'u32[72,128]{1,0:T(1,128)}', space=vmem, size = 0x9000, scoped, tag = 'internal scratch']
  #allocation2 [shape = 'f32[1,256]{1,0:T(1,128)}', space=vmem, size = 0x400, scoped, tag = 'scratch operand']
  %s0 = inlined_call_operand.hbm [shape: f32[2,4,256], index: 0, kind: input, shape index: {}]
  %s1 = inlined_call_operand.hbm [shape: f32[2,4,256], index: 1, kind: input, shape index: {}]
  %s2 = inlined_call_operand.hbm [shape: f32[1,1], index: 2, kind: output, shape index: {}]
  %s3 = sld [smem:[#allocation0]]
  $region34: #{tpu_custom_call.1} parent=0
    _
  %s5 = ssub.s32 1, %s3
  %s6 = scalar_select 0, %s5, %s3
  $region1: #{tpu_custom_call.1} parent=0
    #allocation3 [shape = 'u8[8192]{0}', space=vmem, size = 0x2000, scoped, tag = 'input window, operand 0, single buffered']
    #allocation4 [shape = 's32[1]{0}', space=sflag, size = 0x4, scoped, tag = 'scoped memory for tpu_custom_call.1']
    #allocation5 [shape = 's32[1]{0}', space=sflag, size = 0x4, scoped, tag = 'scoped memory for tpu_custom_call.1']
    #allocation6 [shape = 'u8[8192]{0}', space=vmem, size = 0x2000, scoped, tag = 'input window, operand 1, single buffered']
    #allocation7 [shape = 's32[1]{0}', space=sflag, size = 0x4, scoped, tag = 'scoped memory for tpu_custom_call.1']
    #allocation8 [shape = 'u8[512]{0}', space=smem, size = 0x200, scoped, tag = 'output window, operand 0, single buffered']
    %7 = vsyncpa [#allocation4], 0
    %8 = vsyncpa [#allocation7], 0
    %9 = vsyncpa [#allocation5], 0
    // Predicated region
    $region2: #{tpu_custom_call.1} parent=1 // pred_check
      _
    $region3: #{tpu_custom_call.1} parent=1 // pred_check_branch
      %11 = sbr.rel (0) target = $region5
    $region4: #{tpu_custom_call.1} parent=1 // pred_region
      %13 = vsyncadd [#allocation4], 0
      %s14 = sshll.u32 %s0, 4
      %s15 = int_to_ptr.hbm [resolvable:$true] %s14
      %s16 = sshll.u32 [#allocation3], 4
      %s17 = int_to_ptr.vmem [resolvable:$true] %s16
      %22 = dma.hbm_to_vmem [thread:$0]  %s15, 256, %s17, [#allocation4], 128, 128, 8
    $region5: #{tpu_custom_call.1} parent=1 // pred_fallthru
      _
    // Predicated region
    $region6: #{tpu_custom_call.1} parent=1 // pred_check
      _
    $region7: #{tpu_custom_call.1} parent=1 // pred_check_branch
      %24 = sbr.rel (0) target = $region9
    $region8: #{tpu_custom_call.1} parent=1 // pred_region
      %26 = vsyncadd [#allocation7], 0
      %s27 = sshll.u32 %s1, 4
      %s28 = int_to_ptr.hbm [resolvable:$true] %s27
      %s29 = sshll.u32 [#allocation6], 4
      %s30 = int_to_ptr.vmem [resolvable:$true] %s29
      %35 = dma.hbm_to_vmem [thread:$0]  %s28, 256, %s30, [#allocation7], 128, 128, 8
    $region9: #{tpu_custom_call.1} parent=1 // pred_fallthru
      _
    // Predicated region
    $region10: #{tpu_custom_call.1} parent=1 // pred_check
      _
    $region11: #{tpu_custom_call.1} parent=1 // pred_check_branch
      %37 = sbr.rel (0) target = $region13
    $region12: #{tpu_custom_call.1} parent=1 // pred_region
      %39 = dma.done [#allocation4], 256
    $region13: #{tpu_custom_call.1} parent=1 // pred_fallthru
      _
    // Predicated region
    $region14: #{tpu_custom_call.1} parent=1 // pred_check
      _
    $region15: #{tpu_custom_call.1} parent=1 // pred_check_branch
      %41 = sbr.rel (0) target = $region17
    $region16: #{tpu_custom_call.1} parent=1 // pred_region
      %43 = dma.done [#allocation7], 256
    $region17: #{tpu_custom_call.1} parent=1 // pred_fallthru
      _
    %p44 = scmp.eq.s32.totalorder 0, 0
    // Predicated region
    $region18: #{tpu_custom_call.1} parent=1 // pred_check
      %p45 = pneg %p44
    $region19: #{tpu_custom_call.1} parent=1 // pred_check_branch
      %47 = sbr.rel (%p45) target = $region21
    $region20: #{tpu_custom_call.1} parent=1 // pred_region
      %v48 = vlaneseq
      %vm49 = vcmp.ge.s32.totalorder %v48, 0
      %vm50 = vcmp.lt.s32.totalorder %v48, 256
      %vm51 = vmand %vm49, %vm50
      %52 = vst.msk [vmem:[#allocation2] sm:$0x3] %vm51, 0.0
    $region21: #{tpu_custom_call.1} parent=1 // pred_fallthru
      _
    %v53 = vld [vmem:[#allocation3] sm:$0xff]
    %v54 = vld [vmem:[#allocation3 + $0x8] sm:$0xff]
    %v55 = vmul.f32 %v53, 0.5
    %v56 = vmul.f32 %v54, 0.5
    %v57 = vld [vmem:[#allocation6] sm:$0xff]
    %v58 = vld [vmem:[#allocation6 + $0x8] sm:$0xff]
    %61 = vst [vmem:[#allocation1] ss:$2 sm:$0xff] %v55
    %v62 = vld.sshfl [vmem:[#allocation1] sm:$0xff pattern:$0x75316420]
    %v63 = vld.sshfl [vmem:[#allocation1 + $0x8] sm:$0xff pattern:$0x75316420]
    %s64 = scalar_lea.vmem [#allocation1], 16
    %65 = vst [vmem:[%s64] ss:$2 sm:$0xff] %v56
    %v66 = vld.sshfl [vmem:[#allocation1 + $0x10] sm:$0xff pattern:$0x75316420]
    %v67 = vld.sshfl [vmem:[#allocation1 + $0x18] sm:$0xff pattern:$0x75316420]
    %vm72 = vcmask 1043456
    %v73 = vsel %vm72, %v62, -inf
    %v74 = vrot.slane %v73, 4
    %v75 = vmax.f32 %v73, %v74
    %v76 = vrot.slane %v75, 2
    %v77 = vmax.f32 %v75, %v76
    %v78 = vrot.slane %v77, 1
    %v79 = vmax.f32 %v77, %v78
    %v80 = vsel %vm72, %v63, -inf
    %v81 = vrot.slane %v80, 4
    %v82 = vmax.f32 %v80, %v81
    %v83 = vrot.slane %v82, 2
    %v84 = vmax.f32 %v82, %v83
    %v85 = vrot.slane %v84, 1
    %v86 = vmax.f32 %v84, %v85
    %v87 = vsel %vm72, %v66, -inf
    %v88 = vrot.slane %v87, 4
    %v89 = vmax.f32 %v87, %v88
    %v90 = vrot.slane %v89, 2
    %v91 = vmax.f32 %v89, %v90
    %v92 = vrot.slane %v91, 1
    %v93 = vmax.f32 %v91, %v92
    %v94 = vsel %vm72, %v67, -inf
    %v95 = vrot.slane %v94, 4
    %v96 = vmax.f32 %v94, %v95
    %v97 = vrot.slane %v96, 2
    %v98 = vmax.f32 %v96, %v97
    %v99 = vrot.slane %v98, 1
    %v100 = vmax.f32 %v98, %v99
    %v105 = vrot.slane %v86, 4
    %v106 = vrot.slane %v100, 4
    %v107 = vsel %vm72, %v79, %v105
    %v108 = vsel %vm72, %v93, %v106
    %v111 = vsub.f32 %v55, %v107
    %v112 = vsub.f32 %v56, %v108
    %v113 = vmul.f32 %v111, 1.442695
    %v114 = vpow.pop %v113
    %v115 = vmul.f32 %v112, 1.442695
    %v116 = vpow.pop %v115
    %119 = vst [vmem:[#allocation1] ss:$2 sm:$0xff] %v114
    %v120 = vld.sshfl [vmem:[#allocation1] sm:$0xff pattern:$0x75316420]
    %v121 = vld.sshfl [vmem:[#allocation1 + $0x8] sm:$0xff pattern:$0x75316420]
    %s122 = scalar_lea.vmem [#allocation1], 16
    %123 = vst [vmem:[%s122] ss:$2 sm:$0xff] %v116
    %v124 = vld.sshfl [vmem:[#allocation1 + $0x10] sm:$0xff pattern:$0x75316420]
    %v125 = vld.sshfl [vmem:[#allocation1 + $0x18] sm:$0xff pattern:$0x75316420]
    %v130 = vsel %vm72, %v120, 0.0
    %v131 = vrot.slane %v130, 4
    %v132 = vadd.f32 %v130, %v131
    %v133 = vrot.slane %v132, 2
    %v134 = vadd.f32 %v132, %v133
    %v135 = vrot.slane %v134, 1
    %v136 = vadd.f32 %v134, %v135
    %v137 = vsel %vm72, %v121, 0.0
    %v138 = vrot.slane %v137, 4
    %v139 = vadd.f32 %v137, %v138
    %v140 = vrot.slane %v139, 2
    %v141 = vadd.f32 %v139, %v140
    %v142 = vrot.slane %v141, 1
    %v143 = vadd.f32 %v141, %v142
    %v144 = vsel %vm72, %v124, 0.0
    %v145 = vrot.slane %v144, 4
    %v146 = vadd.f32 %v144, %v145
    %v147 = vrot.slane %v146, 2
    %v148 = vadd.f32 %v146, %v147
    %v149 = vrot.slane %v148, 1
    %v150 = vadd.f32 %v148, %v149
    %v151 = vsel %vm72, %v125, 0.0
    %v152 = vrot.slane %v151, 4
    %v153 = vadd.f32 %v151, %v152
    %v154 = vrot.slane %v153, 2
    %v155 = vadd.f32 %v153, %v154
    %v156 = vrot.slane %v155, 1
    %v157 = vadd.f32 %v155, %v156
    %v158 = vlog2.pop %v136
    %v159 = vmul.f32 %v158, 0.6931472
    %v160 = vlog2.pop %v143
    %v161 = vmul.f32 %v160, 0.6931472
    %v162 = vlog2.pop %v150
    %v163 = vmul.f32 %v162, 0.6931472
    %v164 = vlog2.pop %v157
    %v165 = vmul.f32 %v164, 0.6931472
    %v166 = vadd.f32 %v79, %v159
    %v167 = vadd.f32 %v86, %v161
    %v168 = vadd.f32 %v93, %v163
    %v169 = vadd.f32 %v100, %v165
    %v174 = vrot.slane %v167, 4
    %v175 = vrot.slane %v169, 4
    %v176 = vsel %vm72, %v166, %v174
    %v177 = vsel %vm72, %v168, %v175
    %v180 = vsub.f32 %v55, %v176
    %v181 = vsub.f32 %v56, %v177
    %vm182 = vcmp.gt.f32.partialorder %v57, 0.0
    %vm183 = vcmp.gt.f32.partialorder %v58, 0.0
    %v184 = vsel %vm182, %v57, 1.0
    %v185 = vsel %vm183, %v58, 1.0
    %v186 = vlog2.pop %v184
    %v187 = vmul.f32 %v186, 0.6931472
    %v188 = vlog2.pop %v185
    %v189 = vmul.f32 %v188, 0.6931472
    %v190 = vsub.f32 %v187, %v180
    %v191 = vsub.f32 %v189, %v181
    %v192 = vmul.f32 %v57, %v190
    %v193 = vmul.f32 %v58, %v191
    %v194 = vsel %vm182, %v192, 0.0
    %v195 = vsel %vm183, %v193, 0.0
    %v196 = vld [vmem:[#allocation2] sm:$0x3]
    %199 = vst [vmem:[#allocation1] ss:$2 sm:$0xff] %v194
    %v200 = vld.sshfl [vmem:[#allocation1] sm:$0xff pattern:$0x75316420]
    %v201 = vld.sshfl [vmem:[#allocation1 + $0x8] sm:$0xff pattern:$0x75316420]
    %s202 = scalar_lea.vmem [#allocation1], 16
    %203 = vst [vmem:[%s202] ss:$2 sm:$0xff] %v195
    %v204 = vld.sshfl [vmem:[#allocation1 + $0x10] sm:$0xff pattern:$0x75316420]
    %v205 = vld.sshfl [vmem:[#allocation1 + $0x18] sm:$0xff pattern:$0x75316420]
    %v210 = vsel %vm72, %v200, 0.0
    %v211 = vsel %vm72, %v204, 0.0
    %v212 = vadd.f32 %v210, %v211
    %v213 = vrot.slane %v212, 4
    %v214 = vadd.f32 %v212, %v213
    %v215 = vrot.slane %v214, 2
    %v216 = vadd.f32 %v214, %v215
    %v217 = vrot.slane %v216, 1
    %v218 = vadd.f32 %v216, %v217
    %v219 = vsel %vm72, %v201, 0.0
    %v220 = vsel %vm72, %v205, 0.0
    %v221 = vadd.f32 %v219, %v220
    %v222 = vrot.slane %v221, 4
    %v223 = vadd.f32 %v221, %v222
    %v224 = vrot.slane %v223, 2
    %v225 = vadd.f32 %v223, %v224
    %v226 = vrot.slane %v225, 1
    %v227 = vadd.f32 %v225, %v226
    %v230 = vrot.slane %v227, 7
    %vm231 = vcmask 1040384
    %v232 = vsel %vm231, %v218, %v230
    %v234 = vadd.f32 %v196, %v232
    %v235 = vlaneseq
    %vm236 = vcmp.ge.s32.totalorder %v235, 0
    %vm237 = vcmp.lt.s32.totalorder %v235, 256
    %vm238 = vmand %vm236, %vm237
    %239 = vst.msk [vmem:[#allocation2] sm:$0x3] %vm238, %v234
    // Predicated region
    $region22: #{tpu_custom_call.1} parent=1 // pred_check
      %p240 = pneg %p44
    $region23: #{tpu_custom_call.1} parent=1 // pred_check_branch
      %242 = sbr.rel (%p240) target = $region25
    $region24: #{tpu_custom_call.1} parent=1 // pred_region
      %v243 = vld [vmem:[#allocation2] sm:$0x3]
      %v245 = vperm.slane %v243, 0
      %v246 = vperm.slane %v243, 1
      %v249 = vsel %vm231, %v245, 0.0
      %v250 = vsel %vm231, %v246, 0.0
      %v251 = vadd.f32 %v249, %v250
      %252 = vadd.xlane.f32.xlu0 %v251
      %v253 = vpop.xlane.xlu0 %252
      %v254 = vrot.slane %v253, 4
      %v255 = vadd.f32 %v253, %v254
      %v256 = vrot.slane %v255, 2
      %v257 = vadd.f32 %v255, %v256
      %v258 = vrot.slane %v257, 1
      %v259 = vadd.f32 %v257, %v258
      %s260 = vtos %v259
      %s261 = scalar_lea.smem [#allocation8], 0
      %262 = sst [smem:[%s261]] %s260
    $region25: #{tpu_custom_call.1} parent=1 // pred_fallthru
      _
    // Predicated region
    $region26: #{tpu_custom_call.1} parent=1 // pred_check
      _
    $region27: #{tpu_custom_call.1} parent=1 // pred_check_branch
      %264 = sbr.rel (0) target = $region29
    $region28: #{tpu_custom_call.1} parent=1 // pred_region
      %266 = vsyncadd [#allocation5], 0
      %s268 = sshll.u32 %s2, 4
      %s269 = int_to_ptr.hbm [resolvable:$true] %s268
      %271 = dma.smem_to_hbm [#allocation8], 16, %s269, [#allocation5]
    $region29: #{tpu_custom_call.1} parent=1 // pred_fallthru
      _
    // Predicated region
    $region30: #{tpu_custom_call.1} parent=1 // pred_check
      _
    $region31: #{tpu_custom_call.1} parent=1 // pred_check_branch
      %273 = sbr.rel (0) target = $region33
    $region32: #{tpu_custom_call.1} parent=1 // pred_region
      %275 = dma.done [#allocation5], 16
    $region33: #{tpu_custom_call.1} parent=1 // pred_fallthru
      _
    %276 = sfence
    %277 = vsyncpa [#allocation4], 1
    %278 = vsyncpa [#allocation7], 1
    %279 = vsyncpa [#allocation5], 1

</llo_original>
